<compile_context>
chip_gen: v5e
topology: v5e:2x2
jax: 0.10.0
libtpu: 0.0.40
codegen_flags: <defaults>
</compile_context>

<pallas_src>
import functools

import jax
import jax.numpy as jnp
from jax.experimental import pallas as pl
from jax.experimental.pallas import tpu as pltpu


def _round_up(x, m):
    return (x + m - 1) // m * m


# --------------------------------------------------------------------------
# Kernels
# --------------------------------------------------------------------------
def _mlp_kernel_resident(x_ref, w1_ref, b1_ref, w2_ref, b2_ref, o_ref):
    """Single reduction step: the whole hidden dim is resident in VMEM."""
    h = jnp.dot(x_ref[...], w1_ref[...], preferred_element_type=jnp.float32)
    h = jnp.maximum(h + b1_ref[...], 0.0)
    y = jnp.dot(h.astype(w2_ref.dtype), w2_ref[...],
                preferred_element_type=jnp.float32)
    o_ref[...] = (y + b2_ref[...]).astype(o_ref.dtype)


def _mlp_kernel_ktiled(x_ref, w1_ref, b1_ref, w2_ref, b2_ref, o_ref, acc_ref):
    """One (batch-tile i, hidden-tile k) step of relu(x@W1+b1)@W2 + b2."""
    k = pl.program_id(1)

    @pl.when(k == 0)
    def _init():
        acc_ref[...] = jnp.zeros_like(acc_ref)

    h = jnp.dot(x_ref[...], w1_ref[...], preferred_element_type=jnp.float32)
    h = jnp.maximum(h + b1_ref[...], 0.0)
    acc_ref[...] += jnp.dot(h.astype(w2_ref.dtype), w2_ref[...],
                            preferred_element_type=jnp.float32)

    @pl.when(k == pl.num_programs(1) - 1)
    def _finalize():
        o_ref[...] = (acc_ref[...] + b2_ref[...]).astype(o_ref.dtype)


# --------------------------------------------------------------------------
# Tile / VMEM selection helpers (all host-side Python on static shapes)
# --------------------------------------------------------------------------
def _vmem_budget():
    """Usable VMEM per TensorCore: 3/4 of physical, capped at 96 MiB.
    v7x (64 MiB physical) -> 48 MiB; v5e/v6e (128 MiB) -> 96 MiB."""
    try:
        cap = int(pltpu.get_tpu_info().vmem_capacity_bytes)
    except Exception:
        cap = 64 << 20  # conservative (v7x-sized) fallback
    return min(cap * 3 // 4, 96 << 20)


def _resolve_mxu_dtype(mxu_dtype, ref_dtype):
    if isinstance(mxu_dtype, str):
        if mxu_dtype != "auto":
            raise ValueError(f"unknown mxu_dtype: {mxu_dtype!r}")
        return jnp.bfloat16 if jnp.dtype(ref_dtype) == jnp.float32 else None
    return mxu_dtype


def _select_feature_tiles(in_dim, hidden_dim, out_dim, x_bytes, w_bytes,
                          o_bytes, budget, block_k):
    """Pick 128-padded feature dims and the hidden (reduction) tile tk.

    Prefers tk == hidden_pad (weights fully VMEM-resident, one HBM pass over
    W1/W2 for the whole call); only shrinks tk when that cannot fit the VMEM
    budget alongside a reasonable (>=256 row) batch tile."""
    in_pad = _round_up(in_dim, 128)
    out_pad = _round_up(out_dim, 128)
    hid128 = _round_up(hidden_dim, 128)

    if block_k is not None:
        tk = _round_up(block_k, 128)
    else:
        tm_target = 256
        tk = hid128
        while True:
            w_foot = 2 * ((in_pad * tk + tk * out_pad) * w_bytes
                          + 8 * (tk + out_pad) * 4)
            per_row = (2 * in_pad * x_bytes + 2 * out_pad * o_bytes
                       + tk * 4 + out_pad * 4)
            if tk <= 128 or w_foot + tm_target * per_row + (2 << 20) <= budget:
                break
            tk = max(128, _round_up(tk // 2, 128))

    hid_pad = _round_up(hidden_dim, tk)
    return in_pad, hid_pad, out_pad, tk


def _select_batch_tile(B, in_pad, hid_pad, out_pad, tk, x_bytes, w_bytes,
                       o_bytes, sublane, budget, block_m):
    """Pick the batch tile tm and padded batch b_pad."""
    single_k = (tk == hid_pad)
    b_sub = _round_up(B, sublane)

    if block_m is not None:
        tm = _round_up(block_m, sublane)
    else:
        # Weight blocks are double-buffered by the pipeline; spend the rest of
        # the budget on the largest batch tile that fits (amortizes the weight
        # pass and the ~0.35 us/step grid overhead).
        w_foot = 2 * ((in_pad * tk + tk * out_pad) * w_bytes
                      + 8 * (tk + out_pad) * 4)
        per_row = (2 * in_pad * x_bytes          # double-buffered x tile
                   + 2 * out_pad * o_bytes       # double-buffered out tile
                   + tk * 4                      # f32 hidden activations
                   + out_pad * 4 * (1 if single_k else 2))  # epilogue / acc
        avail = budget - w_foot - (2 << 20)
        tm_max = max(sublane, avail // per_row // sublane * sublane)
        tm = max(sublane, min(tm_max, 1024, b_sub))

    b_pad = _round_up(B, tm)
    # Present >= 2 batch tiles when the batch allows it, so the "parallel"
    # batch axis can be sharded across both v7x TensorCores.
    if block_m is None and b_pad // tm == 1 and b_sub >= 2 * sublane:
        tm = _round_up((B + 1) // 2, sublane)
        b_pad = _round_up(B, tm)
    return tm, b_pad, single_k


def _vmem_limit(tm, tk, in_pad, out_pad, x_bytes, w_bytes, o_bytes,
                single_k, budget):
    est = (2 * tm * in_pad * x_bytes                      # x tiles
           + 2 * (in_pad * tk + tk * out_pad) * w_bytes   # W1 / W2 blocks
           + 2 * 8 * (tk + out_pad) * 4                   # bias blocks
           + 2 * tm * out_pad * o_bytes                   # out tiles
           + tm * tk * 4 + tm * out_pad * 4)              # f32 temporaries
    if not single_k:
        est += tm * out_pad * 4                           # accumulator scratch
    return int(min(budget, max(32 << 20, int(est * 1.25) + (4 << 20))))


# --------------------------------------------------------------------------
# pallas_call builder (shapes are static Python values at trace time)
# --------------------------------------------------------------------------
def _mlp_pallas_call(xp, w1p, b1p, w2p, b2p, out_dtype, tm, tk, single_k,
                     vmem_limit):
    b_pad, in_pad = xp.shape
    hid_pad = w1p.shape[1]
    out_pad = w2p.shape[1]
    grid_b = b_pad // tm
    o_bytes = jnp.dtype(out_dtype).itemsize

    cost = pl.CostEstimate(
        flops=2 * b_pad * hid_pad * (in_pad + out_pad),
        transcendentals=0,
        bytes_accessed=(xp.size * xp.dtype.itemsize
                        + w1p.size * w1p.dtype.itemsize
                        + b1p.size * b1p.dtype.itemsize
                        + w2p.size * w2p.dtype.itemsize
                        + b2p.size * b2p.dtype.itemsize
                        + b_pad * out_pad * o_bytes))

    if single_k:
        # 1-D grid over batch tiles; weight index_maps are constant, so the
        # pipeline fetches W1/b1/W2/b2 from HBM exactly once for the call.
        return pl.pallas_call(
            _mlp_kernel_resident,
            out_shape=jax.ShapeDtypeStruct((b_pad, out_pad), out_dtype),
            grid_spec=pltpu.PrefetchScalarGridSpec(
                num_scalar_prefetch=0,
                grid=(grid_b,),
                in_specs=[
                    pl.BlockSpec((tm, in_pad), lambda i: (i, 0)),        # x
                    pl.BlockSpec((in_pad, hid_pad), lambda i: (0, 0)),   # W1
                    pl.BlockSpec((1, hid_pad), lambda i: (0, 0)),        # b1
                    pl.BlockSpec((hid_pad, out_pad), lambda i: (0, 0)),  # W2
                    pl.BlockSpec((1, out_pad), lambda i: (0, 0)),        # b2
                ],
                out_specs=pl.BlockSpec((tm, out_pad), lambda i: (i, 0)),
            ),
            compiler_params=pltpu.CompilerParams(
                dimension_semantics=("parallel",),
                vmem_limit_bytes=vmem_limit),
            cost_estimate=cost,
        )(xp, w1p, b1p, w2p, b2p)

    grid_k = hid_pad // tk
    return pl.pallas_call(
        _mlp_kernel_ktiled,
        out_shape=jax.ShapeDtypeStruct((b_pad, out_pad), out_dtype),
        grid_spec=pltpu.PrefetchScalarGridSpec(
            num_scalar_prefetch=0,
            grid=(grid_b, grid_k),                       # reduction axis last
            in_specs=[
                pl.BlockSpec((tm, in_pad), lambda i, k: (i, 0)),    # x
                pl.BlockSpec((in_pad, tk), lambda i, k: (0, k)),    # W1
                pl.BlockSpec((1, tk), lambda i, k: (0, k)),         # b1
                pl.BlockSpec((tk, out_pad), lambda i, k: (k, 0)),   # W2
                pl.BlockSpec((1, out_pad), lambda i, k: (0, 0)),    # b2
            ],
            out_specs=pl.BlockSpec((tm, out_pad), lambda i, k: (i, 0)),
            scratch_shapes=[pltpu.VMEM((tm, out_pad), jnp.float32)],
        ),
        compiler_params=pltpu.CompilerParams(
            dimension_semantics=("parallel", "arbitrary"),
            vmem_limit_bytes=vmem_limit),
        cost_estimate=cost,
    )(xp, w1p, b1p, w2p, b2p)


# --------------------------------------------------------------------------
# Public wrappers
# --------------------------------------------------------------------------
@functools.partial(jax.jit, static_argnames=("block_m", "block_k", "mxu_dtype"))
def mlp_forward(x, w1, b1, w2, b2, *, block_m=None, block_k=None,
                mxu_dtype="auto"):
    """Fused MLP forward: relu(x @ w1 + b1) @ w2 + b2.

    x:  (B, in_dim)
    w1: (in_dim, hidden_dim)   b1: (hidden_dim,) or (1, hidden_dim)
    w2: (hidden_dim, out_dim)  b2: (out_dim,) or (1, out_dim)
    mxu_dtype: "auto" (bf16 when inputs are f32), an explicit dtype, or None
               (no cast). Accumulation and the bias/ReLU epilogue stay f32.
    returns: (B, out_dim) in x.dtype
    """
    B, in_dim = x.shape
    hidden_dim = w1.shape[1]
    out_dim = w2.shape[1]
    out_dtype = x.dtype

    op_dtype = _resolve_mxu_dtype(mxu_dtype, x.dtype)
    x_bytes = jnp.dtype(op_dtype or x.dtype).itemsize
    w_bytes = jnp.dtype(op_dtype or w1.dtype).itemsize
    o_bytes = jnp.dtype(out_dtype).itemsize
    sublane = max(8, 32 // min(x_bytes, 4))   # 8 for f32, 16 for bf16

    budget = _vmem_budget()
    in_pad, hid_pad, out_pad, tk = _select_feature_tiles(
        in_dim, hidden_dim, out_dim, x_bytes, w_bytes, o_bytes, budget, block_k)
    tm, b_pad, single_k = _select_batch_tile(
        B, in_pad, hid_pad, out_pad, tk, x_bytes, w_bytes, o_bytes, sublane,
        budget, block_m)
    vmem_limit = _vmem_limit(tm, tk, in_pad, out_pad, x_bytes, w_bytes,
                             o_bytes, single_k, budget)

    # Zero-pad operands (padding contributes exactly 0 to the sliced result).
    xp = jnp.pad(x, ((0, b_pad - B), (0, in_pad - in_dim)))
    w1p = jnp.pad(w1, ((0, in_pad - in_dim), (0, hid_pad - hidden_dim)))
    b1p = jnp.pad(jnp.reshape(b1, (1, -1)), ((0, 0), (0, hid_pad - hidden_dim)))
    w2p = jnp.pad(w2, ((0, hid_pad - hidden_dim), (0, out_pad - out_dim)))
    b2p = jnp.pad(jnp.reshape(b2, (1, -1)), ((0, 0), (0, out_pad - out_dim)))
    if op_dtype is not None:
        xp = xp.astype(op_dtype)
        w1p = w1p.astype(op_dtype)
        w2p = w2p.astype(op_dtype)

    out_padded = _mlp_pallas_call(xp, w1p, b1p, w2p, b2p, out_dtype,
                                  tm, tk, single_k, vmem_limit)
    return out_padded[:B, :out_dim]


def make_mlp(w1, b1, w2, b2, *, block_m=None, block_k=None, mxu_dtype="auto"):
    """Hoisted variant: pads / casts the weights ONCE and returns a jitted
    forward function of x only (no per-call weight padding / cast traffic)."""
    in_dim, hidden_dim = w1.shape
    out_dim = w2.shape[1]

    op_dtype = _resolve_mxu_dtype(mxu_dtype, w1.dtype)
    w_bytes = jnp.dtype(op_dtype or w1.dtype).itemsize
    sublane = max(8, 32 // min(w_bytes, 4))
    budget = _vmem_budget()

    in_pad, hid_pad, out_pad, tk = _select_feature_tiles(
        in_dim, hidden_dim, out_dim, w_bytes, w_bytes, 4, budget, block_k)

    w1p = jnp.pad(w1, ((0, in_pad - in_dim), (0, hid_pad - hidden_dim)))
    b1p = jnp.pad(jnp.reshape(b1, (1, -1)), ((0, 0), (0, hid_pad - hidden_dim)))
    w2p = jnp.pad(w2, ((0, hid_pad - hidden_dim), (0, out_pad - out_dim)))
    b2p = jnp.pad(jnp.reshape(b2, (1, -1)), ((0, 0), (0, out_pad - out_dim)))
    if op_dtype is not None:
        w1p = w1p.astype(op_dtype)
        w2p = w2p.astype(op_dtype)

    @jax.jit
    def _fwd(x, w1p, b1p, w2p, b2p):
        B, _ = x.shape
        out_dtype = x.dtype
        x_bytes = jnp.dtype(op_dtype or x.dtype).itemsize
        o_bytes = jnp.dtype(out_dtype).itemsize
        tm, b_pad, single_k = _select_batch_tile(
            B, in_pad, hid_pad, out_pad, tk, x_bytes, w_bytes, o_bytes,
            sublane, budget, block_m)
        vmem_limit = _vmem_limit(tm, tk, in_pad, out_pad, x_bytes, w_bytes,
                                 o_bytes, single_k, budget)
        xp = jnp.pad(x, ((0, b_pad - B), (0, in_pad - in_dim)))
        if op_dtype is not None:
            xp = xp.astype(op_dtype)
        out_padded = _mlp_pallas_call(xp, w1p, b1p, w2p, b2p, out_dtype,
                                      tm, tk, single_k, vmem_limit)
        return out_padded[:B, :out_dim]

    return lambda x: _fwd(x, w1p, b1p, w2p, b2p)


def init_mlp_params(key, in_dim, hidden_dim, out_dim, dtype=jnp.float32):
    """Deterministic init mimicking PyTorch nn.Linear default:
    uniform(-1/sqrt(fan_in), 1/sqrt(fan_in)) for weights and biases.
    Weights are stored transposed w.r.t. PyTorch's (out_features, in_features)."""
    k1, k2, k3, k4 = jax.random.split(key, 4)
    bound1 = 1.0 / jnp.sqrt(in_dim)
    bound2 = 1.0 / jnp.sqrt(hidden_dim)
    w1 = jax.random.uniform(k1, (in_dim, hidden_dim), dtype,
                            minval=-bound1, maxval=bound1)
    b1 = jax.random.uniform(k2, (1, hidden_dim), dtype,
                            minval=-bound1, maxval=bound1)
    w2 = jax.random.uniform(k3, (hidden_dim, out_dim), dtype,
                            minval=-bound2, maxval=bound2)
    b2 = jax.random.uniform(k4, (1, out_dim), dtype,
                            minval=-bound2, maxval=bound2)
    return w1, b1, w2, b2


if __name__ == "__main__":
    def ref_mlp(x, w1, b1, w2, b2):
        hp = jax.lax.Precision.HIGHEST
        h = jnp.maximum(jnp.dot(x, w1, precision=hp) + b1, 0.0)
        return jnp.dot(h, w2, precision=hp) + b2

    # --- Test 1: small shapes consistent with the module's forward ----------
    B, in_dim, hidden_dim, out_dim = 8, 16, 32, 8
    kx, kp = jax.random.split(jax.random.PRNGKey(0))
    x = jax.random.normal(kx, (B, in_dim), dtype=jnp.float32)
    w1, b1, w2, b2 = init_mlp_params(kp, in_dim, hidden_dim, out_dim)
    ref = ref_mlp(x, w1, b1, w2, b2)

    # Default path: bf16 MXU operands, f32 accumulate + f32 epilogue.
    out = jax.block_until_ready(mlp_forward(x, w1, b1, w2, b2))
    assert out.shape == (B, out_dim)
    assert jnp.allclose(out, ref, atol=5e-2, rtol=5e-2)

    # Full f32 path.
    out_f32 = jax.block_until_ready(mlp_forward(x, w1, b1, w2, b2,
                                                mxu_dtype=None))
    assert jnp.allclose(out_f32, ref, atol=1e-3, rtol=1e-3)

    # Hoisted-weights variant (weights padded / cast once at build time).
    fwd = make_mlp(w1, b1, w2, b2, mxu_dtype=None)
    out_hoist = jax.block_until_ready(fwd(x))
    assert jnp.allclose(out_hoist, ref, atol=1e-3, rtol=1e-3)

    # --- Test 2: ragged shapes exercising batch padding, the multi-tile
    #     batch grid (>=2 tiles), and the k-tiled reduction path. ------------
    B2, in2, hid2, out2 = 48, 40, 200, 24
    k1, k2 = jax.random.split(jax.random.PRNGKey(1))
    x2 = jax.random.normal(k1, (B2, in2), dtype=jnp.float32)
    p2 = init_mlp_params(k2, in2, hid2, out2)
    ref2 = ref_mlp(x2, *p2)

    out2_def = jax.block_until_ready(mlp_forward(x2, *p2))  # resident weights
    assert out2_def.shape == (B2, out2)
    assert jnp.allclose(out2_def, ref2, atol=5e-2, rtol=5e-2)

    out2_kt = jax.block_until_ready(                         # k-tiled path
        mlp_forward(x2, *p2, block_m=16, block_k=128, mxu_dtype=None))
    assert jnp.allclose(out2_kt, ref2, atol=1e-3, rtol=1e-3)

    print("KERNEL_OK")
</pallas_src>

<mosaic_0001>
module attributes {stable_mosaic.version = 11 : i64} {
  func.func @_mlp_kernel_resident(%arg0: i32, %arg1: memref<16x128xbf16, #tpu.memory_space<vmem>>, %arg2: memref<128x128xbf16, #tpu.memory_space<vmem>>, %arg3: memref<1x128xf32, #tpu.memory_space<vmem>>, %arg4: memref<128x128xbf16, #tpu.memory_space<vmem>>, %arg5: memref<1x128xf32, #tpu.memory_space<vmem>>, %arg6: memref<16x128xf32, #tpu.memory_space<vmem>>) attributes {dimension_semantics = [#tpu.dimension_semantics<parallel>], iteration_bounds = array<i64: 1>, scalar_prefetch = 0 : i64, scratch_operands = 0 : i64, tpu.core_type = #tpu.core_type<tc>, window_params = [{transform_indices = @transform_0, window_bounds = array<i64: 16, 128>}, {pipeline_mode = #tpu.pipeline_mode<synchronous>, transform_indices = @transform_1, window_bounds = array<i64: 128, 128>}, {pipeline_mode = #tpu.pipeline_mode<synchronous>, transform_indices = @transform_2, window_bounds = array<i64: 1, 128>}, {pipeline_mode = #tpu.pipeline_mode<synchronous>, transform_indices = @transform_3, window_bounds = array<i64: 128, 128>}, {pipeline_mode = #tpu.pipeline_mode<synchronous>, transform_indices = @transform_4, window_bounds = array<i64: 1, 128>}, {transform_indices = @transform_5, window_bounds = array<i64: 16, 128>}]} {
    %c0 = arith.constant 0 : index
    %c0_0 = arith.constant 0 : index
    %0 = vector.load %arg1[%c0, %c0_0] : memref<16x128xbf16, #tpu.memory_space<vmem>>, vector<16x128xbf16>
    %c0_1 = arith.constant 0 : index
    %c0_2 = arith.constant 0 : index
    %1 = vector.load %arg2[%c0_1, %c0_2] : memref<128x128xbf16, #tpu.memory_space<vmem>>, vector<128x128xbf16>
    %cst = arith.constant dense<0.000000e+00> : vector<16x128xf32>
    %2 = tpu.matmul %0, %1, %cst {dimension_numbers = #tpu.dot_dimension_numbers<[1], [0], [0], [1], [0, 0, 1, 1], [], []>} : vector<16x128xbf16>, vector<128x128xbf16>, vector<16x128xf32> -> vector<16x128xf32>
    %c0_3 = arith.constant 0 : index
    %c0_4 = arith.constant 0 : index
    %3 = vector.load %arg3[%c0_3, %c0_4] : memref<1x128xf32, #tpu.memory_space<vmem>>, vector<1x128xf32>
    %4 = vector.broadcast %3 : vector<1x128xf32> to vector<16x128xf32>
    %5 = arith.addf %2, %4 : vector<16x128xf32>
    %cst_5 = arith.constant 0.000000e+00 : f32
    %6 = vector.broadcast %cst_5 : f32 to vector<16x128xf32>
    %7 = arith.maximumf %5, %6 : vector<16x128xf32>
    %8 = arith.truncf %7 : vector<16x128xf32> to vector<16x128xbf16>
    %c0_6 = arith.constant 0 : index
    %c0_7 = arith.constant 0 : index
    %9 = vector.load %arg4[%c0_6, %c0_7] : memref<128x128xbf16, #tpu.memory_space<vmem>>, vector<128x128xbf16>
    %cst_8 = arith.constant dense<0.000000e+00> : vector<16x128xf32>
    %10 = tpu.matmul %8, %9, %cst_8 {dimension_numbers = #tpu.dot_dimension_numbers<[1], [0], [0], [1], [0, 0, 1, 1], [], []>} : vector<16x128xbf16>, vector<128x128xbf16>, vector<16x128xf32> -> vector<16x128xf32>
    %c0_9 = arith.constant 0 : index
    %c0_10 = arith.constant 0 : index
    %11 = vector.load %arg5[%c0_9, %c0_10] : memref<1x128xf32, #tpu.memory_space<vmem>>, vector<1x128xf32>
    %12 = vector.broadcast %11 : vector<1x128xf32> to vector<16x128xf32>
    %13 = arith.addf %10, %12 : vector<16x128xf32>
    %c0_11 = arith.constant 0 : index
    %c0_12 = arith.constant 0 : index
    %14 = vector.load %arg6[%c0_11, %c0_12] : memref<16x128xf32, #tpu.memory_space<vmem>>, vector<16x128xf32>
    tpu.vector_store %arg6[%c0_11, %c0_12], %13 {strides = array<i32>} : memref<16x128xf32, #tpu.memory_space<vmem>>, vector<16x128xf32>,
    return
  }
  func.func @transform_0(%arg0: i32) -> (i32, i32) {
    %c0_i32 = arith.constant 0 : i32
    %c0_i32_0 = arith.constant 0 : i32
    return %arg0, %c0_i32 : i32, i32
  }
  func.func @transform_1(%arg0: i32) -> (i32, i32) {
    %c0_i32 = arith.constant 0 : i32
    %c0_i32_0 = arith.constant 0 : i32
    %c0_i32_1 = arith.constant 0 : i32
    return %c0_i32, %c0_i32_0 : i32, i32
  }
  func.func @transform_2(%arg0: i32) -> (i32, i32) {
    %c0_i32 = arith.constant 0 : i32
    %c0_i32_0 = arith.constant 0 : i32
    %c0_i32_1 = arith.constant 0 : i32
    return %c0_i32, %c0_i32_0 : i32, i32
  }
  func.func @transform_3(%arg0: i32) -> (i32, i32) {
    %c0_i32 = arith.constant 0 : i32
    %c0_i32_0 = arith.constant 0 : i32
    %c0_i32_1 = arith.constant 0 : i32
    return %c0_i32, %c0_i32_0 : i32, i32
  }
  func.func @transform_4(%arg0: i32) -> (i32, i32) {
    %c0_i32 = arith.constant 0 : i32
    %c0_i32_0 = arith.constant 0 : i32
    %c0_i32_1 = arith.constant 0 : i32
    return %c0_i32, %c0_i32_0 : i32, i32
  }
  func.func @transform_5(%arg0: i32) -> (i32, i32) {
    %c0_i32 = arith.constant 0 : i32
    %c0_i32_0 = arith.constant 0 : i32
    return %arg0, %c0_i32 : i32, i32
  }
}

</mosaic_0001>

<llo_original>
// kernel: mlp_forward.1
$region0: #{mlp_forward.1}
  #allocation0 [shape = 'u32[]', space=smem, size = 0x4, offset = 0x4, fixed_abs, tag = 'smem constant byte address 0x4 - core index']
  #allocation1 [shape = 'u32[72,128]{1,0:T(1,128)}', space=vmem, size = 0x9000, scoped, tag = 'internal scratch']
  %s0 = inlined_call_operand.vmem [shape: bf16[16,128], index: 0, kind: input, shape index: {}]
  %s1 = inlined_call_operand.vmem [shape: bf16[128,128], index: 1, kind: input, shape index: {}]
  %s2 = inlined_call_operand.vmem [shape: f32[1,128], index: 2, kind: input, shape index: {}]
  %s3 = inlined_call_operand.vmem [shape: bf16[128,128], index: 3, kind: input, shape index: {}]
  %s4 = inlined_call_operand.vmem [shape: f32[1,128], index: 4, kind: input, shape index: {}]
  %s5 = inlined_call_operand.vmem [shape: f32[16,128], index: 5, kind: output, shape index: {}]
  %s6 = sld [smem:[#allocation0]]
  $region30: #{mlp_forward.1} parent=0
    _
  %s8 = ssub.s32 1, %s6
  %s9 = scalar_select 0, %s8, %s6
  // Predicated region
  $region2: #{mlp_forward.1} parent=0 // pred_check
    _
  $region3: #{mlp_forward.1} parent=0 // pred_check_branch
    %11 = sbr.rel (0) target = $region5
  $region4: #{mlp_forward.1} parent=0 // pred_region
    _
  $region5: #{mlp_forward.1} parent=0 // pred_fallthru
    _
  // Predicated region
  $region6: #{mlp_forward.1} parent=0 // pred_check
    _
  $region7: #{mlp_forward.1} parent=0 // pred_check_branch
    %13 = sbr.rel (0) target = $region9
  $region8: #{mlp_forward.1} parent=0 // pred_region
    _
  $region9: #{mlp_forward.1} parent=0 // pred_fallthru
    _
  // Predicated region
  $region10: #{mlp_forward.1} parent=0 // pred_check
    _
  $region11: #{mlp_forward.1} parent=0 // pred_check_branch
    %15 = sbr.rel (0) target = $region13
  $region12: #{mlp_forward.1} parent=0 // pred_region
    _
  $region13: #{mlp_forward.1} parent=0 // pred_fallthru
    _
  // Predicated region
  $region14: #{mlp_forward.1} parent=0 // pred_check
    _
  $region15: #{mlp_forward.1} parent=0 // pred_check_branch
    %17 = sbr.rel (0) target = $region17
  $region16: #{mlp_forward.1} parent=0 // pred_region
    _
  $region17: #{mlp_forward.1} parent=0 // pred_fallthru
    _
  // Predicated region
  $region18: #{mlp_forward.1} parent=0 // pred_check
    _
  $region19: #{mlp_forward.1} parent=0 // pred_check_branch
    %19 = sbr.rel (0) target = $region21
  $region20: #{mlp_forward.1} parent=0 // pred_region
    _
  $region21: #{mlp_forward.1} parent=0 // pred_fallthru
    _
  %v20 = vld [vmem:[%s0] sm:$0xf]
  %v21 = vld [vmem:[%s0 + $0x4] sm:$0xf]
  %v22 = vld [vmem:[%s1] sm:$0xf]
  %v23 = vld [vmem:[%s1 + $0x4] sm:$0xf]
  %v24 = vld [vmem:[%s1 + $0x8] sm:$0xf]
  %v25 = vld [vmem:[%s1 + $0xc] sm:$0xf]
  %v26 = vld [vmem:[%s1 + $0x10] sm:$0xf]
  %v27 = vld [vmem:[%s1 + $0x14] sm:$0xf]
  %v28 = vld [vmem:[%s1 + $0x18] sm:$0xf]
  %v29 = vld [vmem:[%s1 + $0x1c] sm:$0xf]
  %v30 = vld [vmem:[%s1 + $0x20] sm:$0xf]
  %v31 = vld [vmem:[%s1 + $0x24] sm:$0xf]
  %v32 = vld [vmem:[%s1 + $0x28] sm:$0xf]
  %v33 = vld [vmem:[%s1 + $0x2c] sm:$0xf]
  %v34 = vld [vmem:[%s1 + $0x30] sm:$0xf]
  %v35 = vld [vmem:[%s1 + $0x34] sm:$0xf]
  %v36 = vld [vmem:[%s1 + $0x38] sm:$0xf]
  %v37 = vld [vmem:[%s1 + $0x3c] sm:$0xf]
  %v38 = vld [vmem:[%s2] sm:$0x1]
  %v40 = vperm.slane %v38, 0
  %v44 = vunpack.c.l.b16 %v20
  %v45 = vunpack.c.l.b16 %v21
  %v46 = vpack.c.b16 %v45, %v44
  %v64 = vunpack.c.l.b16 %v22
  %v65 = vunpack.c.l.b16 %v23
  %v66 = vunpack.c.l.b16 %v24
  %v67 = vunpack.c.l.b16 %v25
  %v68 = vunpack.c.l.b16 %v26
  %v69 = vunpack.c.l.b16 %v27
  %v70 = vunpack.c.l.b16 %v28
  %v71 = vunpack.c.l.b16 %v29
  %v72 = vunpack.c.l.b16 %v30
  %v73 = vunpack.c.l.b16 %v31
  %v74 = vunpack.c.l.b16 %v32
  %v75 = vunpack.c.l.b16 %v33
  %v76 = vunpack.c.l.b16 %v34
  %v77 = vunpack.c.l.b16 %v35
  %v78 = vunpack.c.l.b16 %v36
  %v79 = vunpack.c.l.b16 %v37
  %v80 = vpack.c.b16 %v65, %v64
  %v81 = vpack.c.b16 %v67, %v66
  %v82 = vpack.c.b16 %v69, %v68
  %v83 = vpack.c.b16 %v71, %v70
  %v84 = vpack.c.b16 %v73, %v72
  %v85 = vpack.c.b16 %v75, %v74
  %v86 = vpack.c.b16 %v77, %v76
  %v87 = vpack.c.b16 %v79, %v78
  %96 = vmatpush.bf16.msra.mxu0 %v87
  %97 = vmatpush.bf16.msra.mxu0 %v86
  %98 = vmatpush.bf16.msra.mxu0 %v85
  %99 = vmatpush.bf16.msra.mxu0 %v84
  %100 = vmatpush.bf16.msra.mxu0 %v83
  %101 = vmatpush.bf16.msra.mxu0 %v82
  %102 = vmatpush.bf16.msra.mxu0 %v81
  %103 = vmatpush.bf16.msra.mxu0 %v80
  %104 = vmatmul.bf16.gmra.mxu0 %v46
  %v105 = vpop.f32.mrf.mxu0
  %v106 = vadd.f32 %v40, %v105
  %v107 = vpop.f32.mrf.mxu0
  %v108 = vadd.f32 %v40, %v107
  %109 = vdwg.mxu0
  %v110 = vmax.f32 %v106, 0.0
  %v111 = vmax.f32 %v108, 0.0
  %v112 = vpack.c.bf16 %v111, %v110
  %v113 = vld [vmem:[%s3] sm:$0xf]
  %v114 = vld [vmem:[%s3 + $0x4] sm:$0xf]
  %v115 = vld [vmem:[%s3 + $0x8] sm:$0xf]
  %v116 = vld [vmem:[%s3 + $0xc] sm:$0xf]
  %v117 = vld [vmem:[%s3 + $0x10] sm:$0xf]
  %v118 = vld [vmem:[%s3 + $0x14] sm:$0xf]
  %v119 = vld [vmem:[%s3 + $0x18] sm:$0xf]
  %v120 = vld [vmem:[%s3 + $0x1c] sm:$0xf]
  %v121 = vld [vmem:[%s3 + $0x20] sm:$0xf]
  %v122 = vld [vmem:[%s3 + $0x24] sm:$0xf]
  %v123 = vld [vmem:[%s3 + $0x28] sm:$0xf]
  %v124 = vld [vmem:[%s3 + $0x2c] sm:$0xf]
  %v125 = vld [vmem:[%s3 + $0x30] sm:$0xf]
  %v126 = vld [vmem:[%s3 + $0x34] sm:$0xf]
  %v127 = vld [vmem:[%s3 + $0x38] sm:$0xf]
  %v128 = vld [vmem:[%s3 + $0x3c] sm:$0xf]
  %v129 = vld [vmem:[%s4] sm:$0x1]
  %v131 = vperm.slane %v129, 0
  %v149 = vunpack.c.l.b16 %v113
  %v150 = vunpack.c.l.b16 %v114
  %v151 = vunpack.c.l.b16 %v115
  %v152 = vunpack.c.l.b16 %v116
  %v153 = vunpack.c.l.b16 %v117
  %v154 = vunpack.c.l.b16 %v118
  %v155 = vunpack.c.l.b16 %v119
  %v156 = vunpack.c.l.b16 %v120
  %v157 = vunpack.c.l.b16 %v121
  %v158 = vunpack.c.l.b16 %v122
  %v159 = vunpack.c.l.b16 %v123
  %v160 = vunpack.c.l.b16 %v124
  %v161 = vunpack.c.l.b16 %v125
  %v162 = vunpack.c.l.b16 %v126
  %v163 = vunpack.c.l.b16 %v127
  %v164 = vunpack.c.l.b16 %v128
  %v165 = vpack.c.b16 %v150, %v149
  %v166 = vpack.c.b16 %v152, %v151
  %v167 = vpack.c.b16 %v154, %v153
  %v168 = vpack.c.b16 %v156, %v155
  %v169 = vpack.c.b16 %v158, %v157
  %v170 = vpack.c.b16 %v160, %v159
  %v171 = vpack.c.b16 %v162, %v161
  %v172 = vpack.c.b16 %v164, %v163
  %181 = vmatpush.bf16.msra.mxu0 %v172
  %182 = vmatpush.bf16.msra.mxu0 %v171
  %183 = vmatpush.bf16.msra.mxu0 %v170
  %184 = vmatpush.bf16.msra.mxu0 %v169
  %185 = vmatpush.bf16.msra.mxu0 %v168
  %186 = vmatpush.bf16.msra.mxu0 %v167
  %187 = vmatpush.bf16.msra.mxu0 %v166
  %188 = vmatpush.bf16.msra.mxu0 %v165
  %189 = vmatmul.bf16.gmra.mxu0 %v112
  %v190 = vpop.f32.mrf.mxu0
  %v191 = vadd.f32 %v131, %v190
  %v192 = vpop.f32.mrf.mxu0
  %v193 = vadd.f32 %v131, %v192
  %194 = vdwg.mxu0
  %195 = vst [vmem:[%s5] sm:$0xff] %v191
  %196 = vst [vmem:[%s5 + $0x8] sm:$0xff] %v193
  // Predicated region
  $region22: #{mlp_forward.1} parent=0 // pred_check
    _
  $region23: #{mlp_forward.1} parent=0 // pred_check_branch
    %198 = sbr.rel (0) target = $region25
  $region24: #{mlp_forward.1} parent=0 // pred_region
    _
  $region25: #{mlp_forward.1} parent=0 // pred_fallthru
    _
  // Predicated region
  $region26: #{mlp_forward.1} parent=0 // pred_check
    _
  $region27: #{mlp_forward.1} parent=0 // pred_check_branch
    %200 = sbr.rel (0) target = $region29
  $region28: #{mlp_forward.1} parent=0 // pred_region
    _
  $region29: #{mlp_forward.1} parent=0 // pred_fallthru
    _

</llo_original>
